<compile_context>
chip_gen: v6e
topology: v6e:2x2x1
jax: 0.10.0
libtpu: 0.0.40
codegen_flags: <defaults>
</compile_context>

<pallas_src>
import jax
import jax.numpy as jnp
from jax import lax
from jax.experimental import pallas as pl
from jax.experimental.pallas import tpu as pltpu

HIDDEN_SIZE = 128
_MAX_TILE_B = 2048  # rows per grid step (multiple of 8)


def _value_net_kernel(x_ref, w1_ref, w2_ref, w3_ref, b12_ref, b3_ref, o_ref):
    # Layer 1: bf16 operands on the MXU, f32 accumulation. astype is a no-op
    # if the producer already hands us bf16 state.
    x = x_ref[...].astype(jnp.bfloat16)                         # (TB, S)
    h1 = jnp.dot(x, w1_ref[...], preferred_element_type=jnp.float32)
    h1 = jnp.maximum(h1 + b12_ref[0:1, :], 0.0)                 # (TB, H) f32

    # Layer 2: cast back to bf16 only for the dot.
    h2 = jnp.dot(h1.astype(jnp.bfloat16), w2_ref[...],
                 preferred_element_type=jnp.float32)
    h2 = jnp.maximum(h2 + b12_ref[1:2, :], 0.0)                 # (TB, H) f32

    # Layer 3 (H -> 1): contract the last dims of (1,H) x (TB,H) so the result
    # is a lane-dense (1, TB) row -> unmasked vector stores, dense writeback.
    out_row = lax.dot_general(w3_ref[...], h2,
                              (((1,), (1,)), ((), ())),
                              preferred_element_type=jnp.float32)
    o_ref[...] = (out_row + b3_ref[0]).astype(o_ref.dtype)      # (1, TB)


def _pick_tiling(batch):
    """Rows per grid step (multiple of 8, <= _MAX_TILE_B) and step count."""
    n_tiles = max(1, -(-batch // _MAX_TILE_B))
    # v7x megacore: if one tile can't hold the batch, keep an even step count
    # so the "parallel" grid axis shards across both TensorCores. Costs nothing
    # on v5e/v6e (single TC).
    if batch > _MAX_TILE_B and n_tiles % 2:
        n_tiles += 1
    tile_b = -(-batch // n_tiles)
    tile_b = -(-tile_b // 8) * 8                                # sublane multiple
    return tile_b, n_tiles


@jax.jit
def value_net_forward(state, params):
    """state: [B, state_size] (f32 or bf16) -> [B, 1] float32."""
    w1, b1, w2, b2, w3, b3 = params
    B, S = state.shape
    H = w1.shape[1]

    tile_b, n_tiles = _pick_tiling(B)
    B_pad = tile_b * n_tiles
    x = state if B_pad == B else jnp.pad(state, ((0, B_pad - B), (0, 0)))

    # Kernel-friendly packing (weight-side only; fused under jit).
    w1_bf = w1.astype(jnp.bfloat16)
    w2_bf = w2.astype(jnp.bfloat16)
    w3_row = w3.reshape(1, H).astype(jnp.float32)               # tiny; keep f32
    b12 = jnp.concatenate(
        [b1.reshape(1, H), b2.reshape(1, H)], axis=0).astype(jnp.float32)
    b3_s = b3.reshape((1,)).astype(jnp.float32)

    const = lambda i: (0, 0)                                    # resident weights

    out = pl.pallas_call(
        _value_net_kernel,
        out_shape=jax.ShapeDtypeStruct((n_tiles, tile_b), jnp.float32),
        grid_spec=pltpu.PrefetchScalarGridSpec(
            num_scalar_prefetch=0,
            grid=(n_tiles,),
            in_specs=[
                pl.BlockSpec((tile_b, S), lambda i: (i, 0)),    # state tile
                pl.BlockSpec((S, H), const),                    # W1 (bf16)
                pl.BlockSpec((H, H), const),                    # W2 (bf16)
                pl.BlockSpec((1, H), const),                    # W3 row (f32)
                pl.BlockSpec((2, H), const),                    # b1,b2 (f32)
                pl.BlockSpec(memory_space=pltpu.MemorySpace.SMEM),  # b3 scalar
            ],
            out_specs=pl.BlockSpec((1, tile_b), lambda i: (i, 0)),  # lane-dense row
        ),
        compiler_params=pltpu.CompilerParams(
            dimension_semantics=("parallel",),
            vmem_limit_bytes=32 * 1024 * 1024,                  # safe on v5e/v6e/v7x
        ),
    )(x, w1_bf, w2_bf, w3_row, b12, b3_s)

    # (n_tiles, tile_b) -> (B, 1); fuses under jit.
    return out.reshape(B_pad)[:B].reshape(B, 1)


def init_value_net_params(key, state_size, hidden=HIDDEN_SIZE):
    """Mimics nn.Linear's U(-1/sqrt(fan_in), 1/sqrt(fan_in)); weights stored bf16."""
    ks = jax.random.split(key, 6)

    def lin(kw, kb, fan_in, fan_out):
        bound = 1.0 / jnp.sqrt(jnp.float32(fan_in))
        w = jax.random.uniform(kw, (fan_in, fan_out), jnp.float32, -bound, bound)
        b = jax.random.uniform(kb, (fan_out,), jnp.float32, -bound, bound)
        return w, b

    w1, b1 = lin(ks[0], ks[1], state_size, hidden)
    w2, b2 = lin(ks[2], ks[3], hidden, hidden)
    w3, b3 = lin(ks[4], ks[5], hidden, 1)
    # MXU-native bf16 weight storage; biases stay f32.
    return (w1.astype(jnp.bfloat16), b1,
            w2.astype(jnp.bfloat16), b2,
            w3.astype(jnp.bfloat16), b3)


def _reference_forward(state, params):
    w1, b1, w2, b2, w3, b3 = params
    w1, w2, w3 = (w.astype(jnp.float32) for w in (w1, w2, w3))
    h1 = jnp.maximum(state.astype(jnp.float32) @ w1 + b1, 0.0)
    h2 = jnp.maximum(h1 @ w2 + b2, 0.0)
    return h2 @ w3 + b3


if __name__ == "__main__":
    key = jax.random.PRNGKey(0)
    k_param, k_state = jax.random.split(key)

    batch = 8
    state_size = 32  # e.g. an observation vector

    params = init_value_net_params(k_param, state_size)
    state = jax.random.normal(k_state, (batch, state_size), jnp.float32)

    out = jax.block_until_ready(value_net_forward(state, params))
    ref = _reference_forward(state, params)

    assert out.shape == (batch, 1), out.shape
    err = jnp.max(jnp.abs(out - ref))
    # bf16 matmul operands with f32 accumulation -> loosened tolerance vs f32 ref.
    assert err < 5e-2, f"max err {err}"

    print("KERNEL_OK")
</pallas_src>

<mosaic_0001>
module attributes {stable_mosaic.version = 11 : i64} {
  func.func @_value_net_kernel(%arg0: i32, %arg1: memref<8x32xf32, #tpu.memory_space<vmem>>, %arg2: memref<32x128xbf16, #tpu.memory_space<vmem>>, %arg3: memref<128x128xbf16, #tpu.memory_space<vmem>>, %arg4: memref<1x128xf32, #tpu.memory_space<vmem>>, %arg5: memref<2x128xf32, #tpu.memory_space<vmem>>, %arg6: memref<1xf32, #tpu.memory_space<smem>>, %arg7: memref<1x8xf32, #tpu.memory_space<vmem>>) attributes {dimension_semantics = [#tpu.dimension_semantics<parallel>], iteration_bounds = array<i64: 1>, scalar_prefetch = 0 : i64, scratch_operands = 0 : i64, tpu.core_type = #tpu.core_type<tc>, window_params = [{transform_indices = @transform_0, window_bounds = array<i64: 8, 32>}, {pipeline_mode = #tpu.pipeline_mode<synchronous>, transform_indices = @transform_1, window_bounds = array<i64: 32, 128>}, {pipeline_mode = #tpu.pipeline_mode<synchronous>, transform_indices = @transform_2, window_bounds = array<i64: 128, 128>}, {pipeline_mode = #tpu.pipeline_mode<synchronous>, transform_indices = @transform_3, window_bounds = array<i64: 1, 128>}, {pipeline_mode = #tpu.pipeline_mode<synchronous>, transform_indices = @transform_4, window_bounds = array<i64: 2, 128>}, {transform_indices = @transform_5, window_bounds = array<i64: 1>}, {transform_indices = @transform_6, window_bounds = array<i64: 1, 8>}]} {
    %c0 = arith.constant 0 : index
    %c0_0 = arith.constant 0 : index
    %0 = vector.load %arg1[%c0, %c0_0] : memref<8x32xf32, #tpu.memory_space<vmem>>, vector<8x32xf32>
    %1 = arith.truncf %0 : vector<8x32xf32> to vector<8x32xbf16>
    %c0_1 = arith.constant 0 : index
    %c0_2 = arith.constant 0 : index
    %2 = vector.load %arg2[%c0_1, %c0_2] : memref<32x128xbf16, #tpu.memory_space<vmem>>, vector<32x128xbf16>
    %cst = arith.constant dense<0.000000e+00> : vector<8x128xf32>
    %3 = tpu.matmul %1, %2, %cst {dimension_numbers = #tpu.dot_dimension_numbers<[1], [0], [0], [1], [0, 0, 1, 1], [], []>} : vector<8x32xbf16>, vector<32x128xbf16>, vector<8x128xf32> -> vector<8x128xf32>
    %c0_3 = arith.constant 0 : index
    %c0_4 = arith.constant 0 : index
    %4 = vector.load %arg5[%c0_3, %c0_4] : memref<2x128xf32, #tpu.memory_space<vmem>>, vector<1x128xf32>
    %5 = vector.broadcast %4 : vector<1x128xf32> to vector<8x128xf32>
    %6 = arith.addf %3, %5 : vector<8x128xf32>
    %cst_5 = arith.constant 0.000000e+00 : f32
    %7 = vector.broadcast %cst_5 : f32 to vector<8x128xf32>
    %8 = arith.maximumf %6, %7 : vector<8x128xf32>
    %9 = arith.truncf %8 : vector<8x128xf32> to vector<8x128xbf16>
    %c0_6 = arith.constant 0 : index
    %c0_7 = arith.constant 0 : index
    %10 = vector.load %arg3[%c0_6, %c0_7] : memref<128x128xbf16, #tpu.memory_space<vmem>>, vector<128x128xbf16>
    %cst_8 = arith.constant dense<0.000000e+00> : vector<8x128xf32>
    %11 = tpu.matmul %9, %10, %cst_8 {dimension_numbers = #tpu.dot_dimension_numbers<[1], [0], [0], [1], [0, 0, 1, 1], [], []>} : vector<8x128xbf16>, vector<128x128xbf16>, vector<8x128xf32> -> vector<8x128xf32>
    %c1 = arith.constant 1 : index
    %c0_9 = arith.constant 0 : index
    %12 = vector.load %arg5[%c1, %c0_9] : memref<2x128xf32, #tpu.memory_space<vmem>>, vector<1x128xf32>
    %13 = vector.broadcast %12 : vector<1x128xf32> to vector<8x128xf32>
    %14 = arith.addf %11, %13 : vector<8x128xf32>
    %cst_10 = arith.constant 0.000000e+00 : f32
    %15 = vector.broadcast %cst_10 : f32 to vector<8x128xf32>
    %16 = arith.maximumf %14, %15 : vector<8x128xf32>
    %c0_11 = arith.constant 0 : index
    %c0_12 = arith.constant 0 : index
    %17 = vector.load %arg4[%c0_11, %c0_12] : memref<1x128xf32, #tpu.memory_space<vmem>>, vector<1x128xf32>
    %cst_13 = arith.constant dense<0.000000e+00> : vector<1x8xf32>
    %18 = tpu.matmul %17, %16, %cst_13 {dimension_numbers = #tpu.dot_dimension_numbers<[1], [1], [0], [0], [0, 0, 1, 0], [], []>} : vector<1x128xf32>, vector<8x128xf32>, vector<1x8xf32> -> vector<1x8xf32>
    %c0_14 = arith.constant 0 : index
    %19 = memref.load %arg6[%c0_14] : memref<1xf32, #tpu.memory_space<smem>>
    %20 = vector.broadcast %19 : f32 to vector<1x8xf32>
    %21 = arith.addf %18, %20 : vector<1x8xf32>
    %c0_15 = arith.constant 0 : index
    %c0_16 = arith.constant 0 : index
    %22 = vector.load %arg7[%c0_15, %c0_16] : memref<1x8xf32, #tpu.memory_space<vmem>>, vector<1x8xf32>
    tpu.vector_store %arg7[%c0_15, %c0_16], %21 {strides = array<i32>} : memref<1x8xf32, #tpu.memory_space<vmem>>, vector<1x8xf32>,
    return
  }
  func.func @transform_0(%arg0: i32) -> (i32, i32) {
    %c0_i32 = arith.constant 0 : i32
    %c0_i32_0 = arith.constant 0 : i32
    return %arg0, %c0_i32 : i32, i32
  }
  func.func @transform_1(%arg0: i32) -> (i32, i32) {
    %c0_i32 = arith.constant 0 : i32
    %c0_i32_0 = arith.constant 0 : i32
    %c0_i32_1 = arith.constant 0 : i32
    return %c0_i32, %c0_i32_0 : i32, i32
  }
  func.func @transform_2(%arg0: i32) -> (i32, i32) {
    %c0_i32 = arith.constant 0 : i32
    %c0_i32_0 = arith.constant 0 : i32
    %c0_i32_1 = arith.constant 0 : i32
    return %c0_i32, %c0_i32_0 : i32, i32
  }
  func.func @transform_3(%arg0: i32) -> (i32, i32) {
    %c0_i32 = arith.constant 0 : i32
    %c0_i32_0 = arith.constant 0 : i32
    %c0_i32_1 = arith.constant 0 : i32
    return %c0_i32, %c0_i32_0 : i32, i32
  }
  func.func @transform_4(%arg0: i32) -> (i32, i32) {
    %c0_i32 = arith.constant 0 : i32
    %c0_i32_0 = arith.constant 0 : i32
    %c0_i32_1 = arith.constant 0 : i32
    return %c0_i32, %c0_i32_0 : i32, i32
  }
  func.func @transform_5(%arg0: i32) -> i32 {
    %c0_i32 = arith.constant 0 : i32
    %c0_i32_0 = arith.constant 0 : i32
    return %c0_i32 : i32
  }
  func.func @transform_6(%arg0: i32) -> (i32, i32) {
    %c0_i32 = arith.constant 0 : i32
    %c0_i32_0 = arith.constant 0 : i32
    return %arg0, %c0_i32 : i32, i32
  }
}

</mosaic_0001>

<llo_original>
// kernel: value_net_forward.1
$region0: #{value_net_forward.1}
  #allocation0 [shape = 'u32[]', space=smem, size = 0x4, offset = 0x4, fixed_abs, tag = 'smem constant byte address 0x4 - core index']
  #allocation1 [shape = 'u32[144,128]{1,0:T(1,128)}', space=vmem, size = 0x12000, scoped, tag = 'internal scratch']
  #allocation2 [shape = 'f32[1]{0:T(128)S(6)}', space=smem, size = 0x200, scoped, tag = 'scoped memory for value_net_forward.1']
  %s0 = inlined_call_operand.vmem [shape: f32[8,32], index: 0, kind: input, shape index: {}]
  %s1 = inlined_call_operand.hbm [shape: bf16[32,128], index: 1, kind: input, shape index: {}]
  %s2 = inlined_call_operand.hbm [shape: bf16[128,128], index: 2, kind: input, shape index: {}]
  %s3 = inlined_call_operand.vmem [shape: f32[1,128], index: 3, kind: input, shape index: {}]
  %s4 = inlined_call_operand.vmem [shape: f32[2,128], index: 4, kind: input, shape index: {}]
  %s5 = inlined_call_operand.<no memory space> [shape: f32[1], index: 5, kind: input, shape index: {}]
  %s6 = inlined_call_operand.hbm [shape: f32[1,8], index: 6, kind: output, shape index: {}]
  %s7 = sld [smem:[#allocation0]]
  $region42: #{value_net_forward.1} parent=0
    _
  %s9 = ssub.s32 1, %s7
  %s10 = scalar_select 0, %s9, %s7
  %11 = sst [smem:[#allocation2]] %s5
  $region1: #{value_net_forward.1} parent=0
    #allocation3 [shape = 'u8[8192]{0}', space=vmem, size = 0x2000, scoped, tag = 'input window, operand 1, single buffered']
    #allocation4 [shape = 's32[1]{0}', space=sflag, size = 0x4, scoped, tag = 'scoped memory for value_net_forward.1']
    #allocation5 [shape = 's32[1]{0}', space=sflag, size = 0x4, scoped, tag = 'scoped memory for value_net_forward.1']
    #allocation6 [shape = 'u8[32768]{0}', space=vmem, size = 0x8000, scoped, tag = 'input window, operand 2, single buffered']
    #allocation7 [shape = 's32[1]{0}', space=sflag, size = 0x4, scoped, tag = 'scoped memory for value_net_forward.1']
    #allocation8 [shape = 'u8[512]{0}', space=vmem, size = 0x400, scoped, tag = 'output window, operand 0, single buffered']
    %12 = vsyncpa [#allocation4], 0
    %13 = vsyncpa [#allocation7], 0
    %14 = vsyncpa [#allocation5], 0
    // Predicated region
    $region2: #{value_net_forward.1} parent=1 // pred_check
      _
    $region3: #{value_net_forward.1} parent=1 // pred_check_branch
      %16 = sbr.rel (0) target = $region5
    $region4: #{value_net_forward.1} parent=1 // pred_region
      _
    $region5: #{value_net_forward.1} parent=1 // pred_fallthru
      _
    // Predicated region
    $region6: #{value_net_forward.1} parent=1 // pred_check
      _
    $region7: #{value_net_forward.1} parent=1 // pred_check_branch
      %18 = sbr.rel (0) target = $region9
    $region8: #{value_net_forward.1} parent=1 // pred_region
      %s20 = ssub.s32 256, 256
      %21 = vsyncadd [#allocation4], %s20
      %s22 = sshll.u32 [#allocation3], 4
      %s23 = int_to_ptr.vmem [resolvable:$true] %s22
      %28 = dma.hbm_to_vmem [thread:$0]  %s1, 256, %s23, [#allocation4], 64, 64, 4
    $region9: #{value_net_forward.1} parent=1 // pred_fallthru
      _
    // Predicated region
    $region10: #{value_net_forward.1} parent=1 // pred_check
      _
    $region11: #{value_net_forward.1} parent=1 // pred_check_branch
      %30 = sbr.rel (0) target = $region13
    $region12: #{value_net_forward.1} parent=1 // pred_region
      %s32 = ssub.s32 1024, 1024
      %33 = vsyncadd [#allocation7], %s32
      %s34 = sshll.u32 [#allocation6], 4
      %s35 = int_to_ptr.vmem [resolvable:$true] %s34
      %40 = dma.hbm_to_vmem [thread:$0]  %s2, 1024, %s35, [#allocation7], 64, 64, 4
    $region13: #{value_net_forward.1} parent=1 // pred_fallthru
      _
    // Predicated region
    $region14: #{value_net_forward.1} parent=1 // pred_check
      _
    $region15: #{value_net_forward.1} parent=1 // pred_check_branch
      %42 = sbr.rel (0) target = $region17
    $region16: #{value_net_forward.1} parent=1 // pred_region
      _
    $region17: #{value_net_forward.1} parent=1 // pred_fallthru
      _
    // Predicated region
    $region18: #{value_net_forward.1} parent=1 // pred_check
      _
    $region19: #{value_net_forward.1} parent=1 // pred_check_branch
      %44 = sbr.rel (0) target = $region21
    $region20: #{value_net_forward.1} parent=1 // pred_region
      _
    $region21: #{value_net_forward.1} parent=1 // pred_fallthru
      _
    // Predicated region
    $region22: #{value_net_forward.1} parent=1 // pred_check
      _
    $region23: #{value_net_forward.1} parent=1 // pred_check_branch
      %46 = sbr.rel (0) target = $region25
    $region24: #{value_net_forward.1} parent=1 // pred_region
      _
    $region25: #{value_net_forward.1} parent=1 // pred_fallthru
      _
    // Predicated region
    $region26: #{value_net_forward.1} parent=1 // pred_check
      _
    $region27: #{value_net_forward.1} parent=1 // pred_check_branch
      %48 = sbr.rel (0) target = $region29
    $region28: #{value_net_forward.1} parent=1 // pred_region
      %49 = dma.done [#allocation4], 256
    $region29: #{value_net_forward.1} parent=1 // pred_fallthru
      _
    // Predicated region
    $region30: #{value_net_forward.1} parent=1 // pred_check
      _
    $region31: #{value_net_forward.1} parent=1 // pred_check_branch
      %51 = sbr.rel (0) target = $region33
    $region32: #{value_net_forward.1} parent=1 // pred_region
      %52 = dma.done [#allocation7], 1024
    $region33: #{value_net_forward.1} parent=1 // pred_fallthru
      _
    %v54 = vld [vmem:[%s0] sm:$0xff]
    %v55 = vpack.c.bf16 %v54, %v54
    %v56 = vld [vmem:[#allocation3] sm:$0xf]
    %v57 = vld [vmem:[#allocation3 + $0x4] sm:$0xf]
    %v58 = vld [vmem:[#allocation3 + $0x8] sm:$0xf]
    %v59 = vld [vmem:[#allocation3 + $0xc] sm:$0xf]
    %v60 = vld [vmem:[%s4] sm:$0x1]
    %v61 = vlaneseq
    %v62 = vshrl.u32 %v61, 7
    %v63 = vsub.s32 0, %v62
    %v64 = vrot.slane %v60, %v63
    %v69 = vunpack.c.l.b16 %v56
    %v70 = vunpack.c.l.b16 %v57
    %v71 = vunpack.c.l.b16 %v58
    %v72 = vunpack.c.l.b16 %v59
    %v73 = vpack.c.b16 %v70, %v69
    %v74 = vpack.c.b16 %v72, %v71
    %vm77 = vcmask 261120
    %v79 = vsel %vm77, %v55, 0
    %81 = vmatprep.subr.bf16.mxu0 0
    %82 = vmatpush1.bf16.msra.mxu0 0
    %83 = vmatprep.subr.bf16.mxu0 0
    %84 = vmatpush1.bf16.msra.mxu0 0
    %85 = vmatprep.subr.bf16.mxu0 0
    %86 = vmatpush1.bf16.msra.mxu0 0
    %87 = vmatprep.subr.bf16.mxu0 0
    %88 = vmatpush1.bf16.msra.mxu0 0
    %89 = vmatprep.subr.bf16.mxu0 0
    %90 = vmatpush1.bf16.msra.mxu0 0
    %91 = vmatprep.subr.bf16.mxu0 0
    %92 = vmatpush1.bf16.msra.mxu0 0
    %93 = vmatprep.subr.bf16.mxu0 0
    %94 = vmatpush1.bf16.msra.mxu0 %v74
    %95 = vmatprep.subr.bf16.mxu0 0
    %96 = vmatpush1.bf16.msra.mxu0 %v73
    %97 = vmatprep.subr.bf16.mxu0 0
    %98 = vmatpush2.bf16.msra.mxu0 0
    %99 = vmatprep.subr.bf16.mxu0 0
    %100 = vmatpush2.bf16.msra.mxu0 0
    %101 = vmatprep.subr.bf16.mxu0 0
    %102 = vmatpush2.bf16.msra.mxu0 0
    %103 = vmatprep.subr.bf16.mxu0 0
    %104 = vmatpush2.bf16.msra.mxu0 0
    %105 = vmatprep.subr.bf16.mxu0 0
    %106 = vmatpush2.bf16.msra.mxu0 0
    %107 = vmatprep.subr.bf16.mxu0 0
    %108 = vmatpush2.bf16.msra.mxu0 0
    %109 = vmatprep.subr.bf16.mxu0 0
    %110 = vmatpush2.bf16.msra.mxu0 0
    %111 = vmatprep.subr.bf16.mxu0 0
    %112 = vmatpush2.bf16.msra.mxu0 0
    %113 = vmatprep.mubr.bf16.mxu0 0
    %114 = vmatmul.mubr.bf16.gmra.mxu0 %v79
    %v115 = vpop.f32.mrf.mxu0
    %v116 = vadd.f32 %v64, %v115
    %v117 = vpop.f32.mrf.mxu0
    %v118 = vpop.f32.mrf.mxu0
    %v119 = vpop.f32.mrf.mxu0
    %120 = vdwg.mxu0
    %v121 = vmax.f32 %v116, 0.0
    %v122 = vpack.c.bf16 %v121, %v121
    %v123 = vld [vmem:[#allocation6] sm:$0xf]
    %v124 = vld [vmem:[#allocation6 + $0x4] sm:$0xf]
    %v125 = vld [vmem:[#allocation6 + $0x8] sm:$0xf]
    %v126 = vld [vmem:[#allocation6 + $0xc] sm:$0xf]
    %v127 = vld [vmem:[#allocation6 + $0x10] sm:$0xf]
    %v128 = vld [vmem:[#allocation6 + $0x14] sm:$0xf]
    %v129 = vld [vmem:[#allocation6 + $0x18] sm:$0xf]
    %v130 = vld [vmem:[#allocation6 + $0x1c] sm:$0xf]
    %v131 = vld [vmem:[#allocation6 + $0x20] sm:$0xf]
    %v132 = vld [vmem:[#allocation6 + $0x24] sm:$0xf]
    %v133 = vld [vmem:[#allocation6 + $0x28] sm:$0xf]
    %v134 = vld [vmem:[#allocation6 + $0x2c] sm:$0xf]
    %v135 = vld [vmem:[#allocation6 + $0x30] sm:$0xf]
    %v136 = vld [vmem:[#allocation6 + $0x34] sm:$0xf]
    %v137 = vld [vmem:[#allocation6 + $0x38] sm:$0xf]
    %v138 = vld [vmem:[#allocation6 + $0x3c] sm:$0xf]
    %v139 = vld [vmem:[%s4 + $0x1] sm:$0x1]
    %v140 = vlaneseq
    %v141 = vshrl.u32 %v140, 7
    %v142 = vsub.s32 0, %v141
    %v143 = vrot.slane %v139, %v142
    %v160 = vunpack.c.l.b16 %v123
    %v161 = vunpack.c.l.b16 %v124
    %v162 = vunpack.c.l.b16 %v125
    %v163 = vunpack.c.l.b16 %v126
    %v164 = vunpack.c.l.b16 %v127
    %v165 = vunpack.c.l.b16 %v128
    %v166 = vunpack.c.l.b16 %v129
    %v167 = vunpack.c.l.b16 %v130
    %v168 = vunpack.c.l.b16 %v131
    %v169 = vunpack.c.l.b16 %v132
    %v170 = vunpack.c.l.b16 %v133
    %v171 = vunpack.c.l.b16 %v134
    %v172 = vunpack.c.l.b16 %v135
    %v173 = vunpack.c.l.b16 %v136
    %v174 = vunpack.c.l.b16 %v137
    %v175 = vunpack.c.l.b16 %v138
    %v176 = vpack.c.b16 %v161, %v160
    %v177 = vpack.c.b16 %v163, %v162
    %v178 = vpack.c.b16 %v165, %v164
    %v179 = vpack.c.b16 %v167, %v166
    %v180 = vpack.c.b16 %v169, %v168
    %v181 = vpack.c.b16 %v171, %v170
    %v182 = vpack.c.b16 %v173, %v172
    %v183 = vpack.c.b16 %v175, %v174
    %192 = vmatprep.subr.bf16.mxu0 0
    %193 = vmatpush1.bf16.msra.mxu0 %v183
    %194 = vmatprep.subr.bf16.mxu0 0
    %195 = vmatpush1.bf16.msra.mxu0 %v182
    %196 = vmatprep.subr.bf16.mxu0 0
    %197 = vmatpush1.bf16.msra.mxu0 %v181
    %198 = vmatprep.subr.bf16.mxu0 0
    %199 = vmatpush1.bf16.msra.mxu0 %v180
    %200 = vmatprep.subr.bf16.mxu0 0
    %201 = vmatpush1.bf16.msra.mxu0 %v179
    %202 = vmatprep.subr.bf16.mxu0 0
    %203 = vmatpush1.bf16.msra.mxu0 %v178
    %204 = vmatprep.subr.bf16.mxu0 0
    %205 = vmatpush1.bf16.msra.mxu0 %v177
    %206 = vmatprep.subr.bf16.mxu0 0
    %207 = vmatpush1.bf16.msra.mxu0 %v176
    %208 = vmatprep.subr.bf16.mxu0 0
    %209 = vmatpush2.bf16.msra.mxu0 0
    %210 = vmatprep.subr.bf16.mxu0 0
    %211 = vmatpush2.bf16.msra.mxu0 0
    %212 = vmatprep.subr.bf16.mxu0 0
    %213 = vmatpush2.bf16.msra.mxu0 0
    %214 = vmatprep.subr.bf16.mxu0 0
    %215 = vmatpush2.bf16.msra.mxu0 0
    %216 = vmatprep.subr.bf16.mxu0 0
    %217 = vmatpush2.bf16.msra.mxu0 0
    %218 = vmatprep.subr.bf16.mxu0 0
    %219 = vmatpush2.bf16.msra.mxu0 0
    %220 = vmatprep.subr.bf16.mxu0 0
    %221 = vmatpush2.bf16.msra.mxu0 0
    %222 = vmatprep.subr.bf16.mxu0 0
    %223 = vmatpush2.bf16.msra.mxu0 0
    %224 = vmatprep.mubr.bf16.mxu0 0
    %225 = vmatmul.mubr.bf16.gmra.mxu0 %v122
    %v226 = vpop.f32.mrf.mxu0
    %v227 = vadd.f32 %v143, %v226
    %v228 = vpop.f32.mrf.mxu0
    %v229 = vpop.f32.mrf.mxu0
    %v230 = vpop.f32.mrf.mxu0
    %231 = vdwg.mxu0
    %v232 = vmax.f32 %v227, 0.0
    %v233 = vld [vmem:[%s3] sm:$0x1]
    %s234 = sld [smem:[#allocation2]]
    %v235 = vstv %s234
    %236 = vmatprep.subr.mxu0 0.0
    %237 = vmatpush1.xpose.msra.mxu0 0.0
    %238 = vmatprep.subr.mxu0 0.0
    %239 = vmatpush1.xpose.msra.mxu0 0.0
    %240 = vmatprep.subr.mxu0 0.0
    %241 = vmatpush1.xpose.msra.mxu0 0.0
    %242 = vmatprep.subr.mxu0 0.0
    %243 = vmatpush1.xpose.msra.mxu0 0.0
    %244 = vmatprep.subr.mxu0 0.0
    %245 = vmatpush1.xpose.msra.mxu0 0.0
    %246 = vmatprep.subr.mxu0 0.0
    %247 = vmatpush1.xpose.msra.mxu0 0.0
    %248 = vmatprep.subr.mxu0 0.0
    %249 = vmatpush1.xpose.msra.mxu0 0.0
    %250 = vmatprep.subr.mxu0 0.0
    %251 = vmatpush1.xpose.msra.mxu0 0.0
    %252 = vmatprep.subr.mxu0 0.0
    %253 = vmatpush1.xpose.msra.mxu0 0.0
    %254 = vmatprep.subr.mxu0 0.0
    %255 = vmatpush1.xpose.msra.mxu0 0.0
    %256 = vmatprep.subr.mxu0 0.0
    %257 = vmatpush1.xpose.msra.mxu0 0.0
    %258 = vmatprep.subr.mxu0 0.0
    %259 = vmatpush1.xpose.msra.mxu0 0.0
    %260 = vmatprep.subr.mxu0 0.0
    %261 = vmatpush1.xpose.msra.mxu0 0.0
    %262 = vmatprep.subr.mxu0 0.0
    %263 = vmatpush1.xpose.msra.mxu0 0.0
    %264 = vmatprep.subr.mxu0 0.0
    %265 = vmatpush1.xpose.msra.mxu0 0.0
    %266 = vmatprep.subr.mxu0 0.0
    %267 = vmatpush1.xpose.msra.mxu0 %v232
    %268 = vmatprep.subr.mxu0 0.0
    %269 = vmatpush2.xpose.msra.mxu0 0.0
    %270 = vmatprep.subr.mxu0 0.0
    %271 = vmatpush2.xpose.msra.mxu0 0.0
    %272 = vmatprep.subr.mxu0 0.0
    %273 = vmatpush2.xpose.msra.mxu0 0.0
    %274 = vmatprep.subr.mxu0 0.0
    %275 = vmatpush2.xpose.msra.mxu0 0.0
    %276 = vmatprep.subr.mxu0 0.0
    %277 = vmatpush2.xpose.msra.mxu0 0.0
    %278 = vmatprep.subr.mxu0 0.0
    %279 = vmatpush2.xpose.msra.mxu0 0.0
    %280 = vmatprep.subr.mxu0 0.0
    %281 = vmatpush2.xpose.msra.mxu0 0.0
    %282 = vmatprep.subr.mxu0 0.0
    %283 = vmatpush2.xpose.msra.mxu0 0.0
    %284 = vmatprep.subr.mxu0 0.0
    %285 = vmatpush2.xpose.msra.mxu0 0.0
    %286 = vmatprep.subr.mxu0 0.0
    %287 = vmatpush2.xpose.msra.mxu0 0.0
    %288 = vmatprep.subr.mxu0 0.0
    %289 = vmatpush2.xpose.msra.mxu0 0.0
    %290 = vmatprep.subr.mxu0 0.0
    %291 = vmatpush2.xpose.msra.mxu0 0.0
    %292 = vmatprep.subr.mxu0 0.0
    %293 = vmatpush2.xpose.msra.mxu0 0.0
    %294 = vmatprep.subr.mxu0 0.0
    %295 = vmatpush2.xpose.msra.mxu0 0.0
    %296 = vmatprep.subr.mxu0 0.0
    %297 = vmatpush2.xpose.msra.mxu0 0.0
    %298 = vmatprep.subr.mxu0 0.0
    %299 = vmatpush2.xpose.msra.mxu0 0.0
    %300 = vmatprep.mubr.f32.mxu0 0.0
    %301 = vmatmul.mubr.f32.gmra.mxu0 %v233
    %v302 = vpop.f32.mrf.mxu0
    %v303 = vadd.f32 %v235, %v302
    %v304 = vpop.f32.mrf.mxu0
    %305 = vdwg.mxu0
    %vm306 = vcmask 57344
    %307 = vst.msk [vmem:[#allocation8] sm:$0x1] %vm306, %v303
    // Predicated region
    $region34: #{value_net_forward.1} parent=1 // pred_check
      _
    $region35: #{value_net_forward.1} parent=1 // pred_check_branch
      %309 = sbr.rel (0) target = $region37
    $region36: #{value_net_forward.1} parent=1 // pred_region
      %s311 = ssub.s32 16, 16
      %312 = vsyncadd [#allocation5], %s311
      %s314 = sshll.u32 [#allocation8], 4
      %s315 = int_to_ptr.vmem [resolvable:$true] %s314
      %317 = dma.vmem_to_hbm [thread:$0]  %s315, 16, %s6, [#allocation5]
    $region37: #{value_net_forward.1} parent=1 // pred_fallthru
      _
    // Predicated region
    $region38: #{value_net_forward.1} parent=1 // pred_check
      _
    $region39: #{value_net_forward.1} parent=1 // pred_check_branch
      %319 = sbr.rel (0) target = $region41
    $region40: #{value_net_forward.1} parent=1 // pred_region
      %320 = dma.done [#allocation5], 16
    $region41: #{value_net_forward.1} parent=1 // pred_fallthru
      _
    %321 = vsyncpa [#allocation4], 1
    %322 = vsyncpa [#allocation7], 1
    %323 = vsyncpa [#allocation5], 1

</llo_original>
